<compile_context>
chip_gen: v6e
topology: v6e:2x2x1
jax: 0.10.0
libtpu: 0.0.40
codegen_flags: <defaults>
</compile_context>

<pallas_src>
import functools

import jax
import jax.numpy as jnp
from jax.experimental import pallas as pl
from jax.experimental.pallas import tpu as pltpu

GAMMA = 2.0                    # applied as an explicit square (gamma == 2)
ALPHA = (0.25, 0.75)           # FocalLoss(alpha=[0.25, 0.75]) in LaneATTLoss
CLS_WEIGHT = 1.0
REG_WEIGHT = 1.0


def _round_up(x, m):
    return ((x + m - 1) // m) * m


def _cdiv(a, b):
    return (a + b - 1) // b


# ---------------------------------------------------------------------------
# Fused kernel: focal loss (2-class) + smooth L1, both mean-reduced.
# All refs are lane-dense (rows, 128) blocks; out_ref is SMEM f32[3].
# ---------------------------------------------------------------------------
def _fused_loss_kernel(l0_ref, l1_ref, lab_ref, rx_ref, rt_ref,
                       out_ref, cls_acc, reg_acc, *, n_cls, n_reg):
    i = pl.program_id(0)

    @pl.when(i == 0)
    def _init():
        cls_acc[...] = jnp.zeros_like(cls_acc)
        reg_acc[...] = jnp.zeros_like(reg_acc)

    # ---- focal partial: 2-class softmax prob == sigmoid(logit_lab - other) ----
    l0 = l0_ref[...].astype(jnp.float32)
    l1 = l1_ref[...].astype(jnp.float32)
    lab = lab_ref[...]
    is1 = lab == 1
    s = jnp.where(is1, l1 - l0, l0 - l1)          # logit margin of labeled class
    p = 1.0 / (1.0 + jnp.exp(-s))                 # 1 exp + 1 recip (EUP)
    p = jnp.clip(p, 1e-06, 0.999999)              # same clamp as the reference
    alpha = jnp.where(is1, ALPHA[1], ALPHA[0])
    # one-hot semantics: labels outside {0,1} (incl. -1 padding) -> 0 loss
    onehot = ((lab == 0) | is1).astype(jnp.float32)
    q = 1.0 - p
    focal = (alpha * onehot) * (q * q) * (-jnp.log(p))     # gamma=2 -> square
    tf = focal.shape[0]
    # Fold (TF,128) tile into the resident (8,128) accumulator: pure VPU vreg adds.
    cls_acc[...] += jnp.sum(focal.reshape(tf // 8, 8, 128), axis=0)

    # ---- smooth-L1 partial (zero padding contributes exactly 0) ----
    d = rx_ref[...].astype(jnp.float32) - rt_ref[...].astype(jnp.float32)
    ad = jnp.abs(d)
    sl1 = jnp.where(ad < 1.0, 0.5 * d * d, ad - 0.5)
    tr = sl1.shape[0]
    reg_acc[...] += jnp.sum(sl1.reshape(tr // 8, 8, 128), axis=0)

    @pl.when(i == pl.num_programs(0) - 1)
    def _finalize():
        cls = jnp.sum(cls_acc[...]) / n_cls       # single cross-lane reduce
        reg = jnp.sum(reg_acc[...]) / n_reg
        out_ref[0] = CLS_WEIGHT * cls + REG_WEIGHT * reg
        out_ref[1] = cls
        out_ref[2] = reg


# ---------------------------------------------------------------------------
# Wrapper
# ---------------------------------------------------------------------------
def _to_lane_slab(flat, rows_padded, pad_value):
    """Flat 1-D array -> zero/constant-padded lane-dense (rows_padded, 128) slab."""
    n = flat.shape[0]
    total = rows_padded * 128
    if total != n:
        flat = jnp.pad(flat, (0, total - n), constant_values=pad_value)
    return flat.reshape(rows_padded, 128)


def laneatt_loss(predictions, targets, *,
                 focal_block_rows=4096,   # 4096x128 elems/step/plane -> ~6 MiB focal block (f32)
                 reg_block_rows=4096):    # ~4 MiB reg block per step (f32)
    class_logits = predictions["class_logits"]
    reg_output = predictions["reg_output"]
    class_labels = targets["class_labels"]
    reg_targets = targets["reg_targets"]

    B, C, H, W = class_logits.shape
    assert C == 2, "FocalLoss configured with n_class=2"
    n_cls = B * H * W                     # un-padded element counts (for the means)
    n_reg = reg_output.size

    rows_f = _cdiv(n_cls, 128)            # focal rows (per plane / labels)
    rows_r = _cdiv(n_reg, 128)            # reg rows

    # Balanced stepping: one common step count; both streams advance every step.
    n_steps = max(_cdiv(rows_f, focal_block_rows),
                  _cdiv(rows_r, reg_block_rows), 1)
    TF = _round_up(_cdiv(rows_f, n_steps), 8)
    TR = _round_up(_cdiv(rows_r, n_steps), 8)
    rows_f_p = TF * n_steps
    rows_r_p = TR * n_steps

    # Lane-dense slabs (wrapper-side layout plumbing; padding contributes 0 loss).
    l0 = _to_lane_slab(class_logits[:, 0].reshape(-1), rows_f_p, 0)
    l1 = _to_lane_slab(class_logits[:, 1].reshape(-1), rows_f_p, 0)
    lab = _to_lane_slab(class_labels.reshape(-1).astype(jnp.int32), rows_f_p, -1)
    rx = _to_lane_slab(reg_output.reshape(-1), rows_r_p, 0)
    rt = _to_lane_slab(reg_targets.reshape(-1), rows_r_p, 0)

    kernel = functools.partial(_fused_loss_kernel,
                               n_cls=float(n_cls), n_reg=float(n_reg))

    # Explicit VMEM budget: double-buffered blocks + accumulators + slack.
    blk_bytes = (TF * 128 * (2 * l0.dtype.itemsize + lab.dtype.itemsize)
                 + TR * 128 * (rx.dtype.itemsize + rt.dtype.itemsize))
    vmem_limit = int(max(2 * blk_bytes + 2 * 8 * 128 * 4 + (1 << 20),
                         32 * 1024 * 1024))   # <= ~22 MiB blocks with default caps

    cost = pl.CostEstimate(
        flops=15 * rows_f_p * 128 + 5 * rows_r_p * 128,
        transcendentals=3 * rows_f_p * 128,   # exp + recip + log per class elem
        bytes_accessed=int(2 * l0.size * l0.dtype.itemsize + lab.size * 4
                           + 2 * rx.size * rx.dtype.itemsize + 12),
    )

    grid_spec = pltpu.PrefetchScalarGridSpec(
        num_scalar_prefetch=0,
        grid=(n_steps,),
        in_specs=[
            pl.BlockSpec((TF, 128), lambda i: (i, 0)),    # logits channel 0
            pl.BlockSpec((TF, 128), lambda i: (i, 0)),    # logits channel 1
            pl.BlockSpec((TF, 128), lambda i: (i, 0)),    # labels
            pl.BlockSpec((TR, 128), lambda i: (i, 0)),    # reg output
            pl.BlockSpec((TR, 128), lambda i: (i, 0)),    # reg target
        ],
        out_specs=pl.BlockSpec(memory_space=pltpu.MemorySpace.SMEM),
        scratch_shapes=[pltpu.VMEM((8, 128), jnp.float32),
                        pltpu.VMEM((8, 128), jnp.float32)],
    )

    out = pl.pallas_call(
        kernel,
        grid_spec=grid_spec,
        out_shape=jax.ShapeDtypeStruct((3,), jnp.float32),
        compiler_params=pltpu.CompilerParams(
            dimension_semantics=("arbitrary",),
            vmem_limit_bytes=vmem_limit),
        cost_estimate=cost,
    )(l0, l1, lab, rx, rt)

    return out[0], out[1], out[2]


# ---------------------------------------------------------------------------
# Pure-JAX reference (sanity check, mirrors the PyTorch module)
# ---------------------------------------------------------------------------
def _reference(predictions, targets):
    logits = predictions["class_logits"].astype(jnp.float32)
    labels = targets["class_labels"].astype(jnp.int32)
    pt = jax.nn.softmax(logits, axis=1)
    pt = jnp.clip(pt, 1e-06, 0.999999)
    loss = 0.0
    for i in range(2):
        oh = (labels == i).astype(jnp.float32)
        loss = loss - ALPHA[i] * (1.0 - pt[:, i]) ** GAMMA * oh * jnp.log(pt[:, i])
    cls = jnp.mean(loss)
    d = (predictions["reg_output"].astype(jnp.float32)
         - targets["reg_targets"].astype(jnp.float32))
    ad = jnp.abs(d)
    reg = jnp.mean(jnp.where(ad < 1.0, 0.5 * d * d, ad - 0.5))
    return CLS_WEIGHT * cls + REG_WEIGHT * reg, cls, reg


if __name__ == "__main__":
    key = jax.random.PRNGKey(0)
    k1, k2, k3, k4 = jax.random.split(key, 4)

    B, C, H, W = 2, 2, 16, 16       # class maps
    A, R = 8, 32                    # anchors x regression dims

    class_logits = jax.random.normal(k1, (B, C, H, W), dtype=jnp.float32)
    # include -1 "ignore" labels to exercise the one-hot masking path
    class_labels = jax.random.randint(k2, (B, H, W), -1, 2, dtype=jnp.int32)
    reg_output = jax.random.normal(k3, (B, A, R), dtype=jnp.float32)
    reg_targets = jax.random.normal(k4, (B, A, R), dtype=jnp.float32)

    predictions = {"class_logits": class_logits, "reg_output": reg_output}
    targets = {"class_labels": class_labels, "reg_targets": reg_targets}

    total, cls, reg = laneatt_loss(predictions, targets)
    jax.block_until_ready((total, cls, reg))

    ref_total, ref_cls, ref_reg = _reference(predictions, targets)
    assert jnp.allclose(total, ref_total, atol=1e-5, rtol=1e-5), (total, ref_total)
    assert jnp.allclose(cls, ref_cls, atol=1e-5, rtol=1e-5), (cls, ref_cls)
    assert jnp.allclose(reg, ref_reg, atol=1e-5, rtol=1e-5), (reg, ref_reg)

    print("KERNEL_OK")
</pallas_src>

<mosaic_0001>
module attributes {stable_mosaic.version = 11 : i64} {
  func.func @_fused_loss_kernel(%arg0: i32, %arg1: memref<8x128xf32, #tpu.memory_space<vmem>>, %arg2: memref<8x128xf32, #tpu.memory_space<vmem>>, %arg3: memref<8x128xi32, #tpu.memory_space<vmem>>, %arg4: memref<8x128xf32, #tpu.memory_space<vmem>>, %arg5: memref<8x128xf32, #tpu.memory_space<vmem>>, %arg6: memref<3xf32, #tpu.memory_space<smem>>, %arg7: memref<8x128xf32, #tpu.memory_space<vmem>>, %arg8: memref<8x128xf32, #tpu.memory_space<vmem>>) attributes {dimension_semantics = [#tpu.dimension_semantics<arbitrary>], iteration_bounds = array<i64: 1>, scalar_prefetch = 0 : i64, scratch_operands = 2 : i64, tpu.core_type = #tpu.core_type<tc>, window_params = [{transform_indices = @transform_0, window_bounds = array<i64: 8, 128>}, {transform_indices = @transform_1, window_bounds = array<i64: 8, 128>}, {transform_indices = @transform_2, window_bounds = array<i64: 8, 128>}, {transform_indices = @transform_3, window_bounds = array<i64: 8, 128>}, {transform_indices = @transform_4, window_bounds = array<i64: 8, 128>}, {transform_indices = @transform_5, window_bounds = array<i64: 3>}]} {
    %c0_i32 = arith.constant 0 : i32
    %0 = arith.cmpi eq, %arg0, %c0_i32 : i32
    %1 = arith.extui %0 : i1 to i32
    %c0_i32_0 = arith.constant 0 : i32
    %2 = arith.cmpi ne, %1, %c0_i32_0 : i32
    scf.if %2 {
      %cst_34 = arith.constant 0.000000e+00 : f32
      %64 = vector.broadcast %cst_34 : f32 to vector<8x128xf32>
      %c0_35 = arith.constant 0 : index
      %c0_36 = arith.constant 0 : index
      %65 = vector.load %arg7[%c0_35, %c0_36] : memref<8x128xf32, #tpu.memory_space<vmem>>, vector<8x128xf32>
      tpu.vector_store %arg7[%c0_35, %c0_36], %64 {strides = array<i32>} : memref<8x128xf32, #tpu.memory_space<vmem>>, vector<8x128xf32>,
      %cst_37 = arith.constant 0.000000e+00 : f32
      %66 = vector.broadcast %cst_37 : f32 to vector<8x128xf32>
      %c0_38 = arith.constant 0 : index
      %c0_39 = arith.constant 0 : index
      %67 = vector.load %arg8[%c0_38, %c0_39] : memref<8x128xf32, #tpu.memory_space<vmem>>, vector<8x128xf32>
      tpu.vector_store %arg8[%c0_38, %c0_39], %66 {strides = array<i32>} : memref<8x128xf32, #tpu.memory_space<vmem>>, vector<8x128xf32>,
    } else {
    }
    %c0 = arith.constant 0 : index
    %c0_1 = arith.constant 0 : index
    %3 = vector.load %arg1[%c0, %c0_1] : memref<8x128xf32, #tpu.memory_space<vmem>>, vector<8x128xf32>
    %c0_2 = arith.constant 0 : index
    %c0_3 = arith.constant 0 : index
    %4 = vector.load %arg2[%c0_2, %c0_3] : memref<8x128xf32, #tpu.memory_space<vmem>>, vector<8x128xf32>
    %c0_4 = arith.constant 0 : index
    %c0_5 = arith.constant 0 : index
    %5 = vector.load %arg3[%c0_4, %c0_5] : memref<8x128xi32, #tpu.memory_space<vmem>>, vector<8x128xi32>
    %c1_i32 = arith.constant 1 : i32
    %6 = vector.broadcast %c1_i32 : i32 to vector<8x128xi32>
    %7 = arith.cmpi eq, %5, %6 : vector<8x128xi32>
    %8 = arith.subf %4, %3 : vector<8x128xf32>
    %9 = arith.subf %3, %4 : vector<8x128xf32>
    %10 = arith.select %7, %8, %9 : vector<8x128xi1>, vector<8x128xf32>
    %cst = arith.constant 0.000000e+00 : f32
    %11 = vector.broadcast %cst : f32 to vector<8x128xf32>
    %12 = arith.subf %11, %10 : vector<8x128xf32>
    %13 = math.exp %12 : vector<8x128xf32>
    %cst_6 = arith.constant 1.000000e+00 : f32
    %14 = vector.broadcast %cst_6 : f32 to vector<8x128xf32>
    %15 = arith.addf %14, %13 : vector<8x128xf32>
    %cst_7 = arith.constant 1.000000e+00 : f32
    %16 = vector.broadcast %cst_7 : f32 to vector<8x128xf32>
    %17 = arith.divf %16, %15 : vector<8x128xf32>
    %cst_8 = arith.constant 9.99999997E-7 : f32
    %cst_9 = arith.constant 0.999998986 : f32
    %18 = vector.broadcast %cst_8 : f32 to vector<8x128xf32>
    %19 = arith.maximumf %18, %17 : vector<8x128xf32>
    %20 = vector.broadcast %cst_9 : f32 to vector<8x128xf32>
    %21 = arith.minimumf %20, %19 : vector<8x128xf32>
    %cst_10 = arith.constant 7.500000e-01 : f32
    %cst_11 = arith.constant 2.500000e-01 : f32
    %22 = vector.broadcast %cst_10 : f32 to vector<8x128xf32>
    %23 = vector.broadcast %cst_11 : f32 to vector<8x128xf32>
    %24 = arith.select %7, %22, %23 : vector<8x128xi1>, vector<8x128xf32>
    %c0_i32_12 = arith.constant 0 : i32
    %25 = vector.broadcast %c0_i32_12 : i32 to vector<8x128xi32>
    %26 = arith.cmpi eq, %5, %25 : vector<8x128xi32>
    %27 = arith.ori %26, %7 : vector<8x128xi1>
    %28 = arith.extui %27 : vector<8x128xi1> to vector<8x128xi32>
    %29 = arith.sitofp %28 : vector<8x128xi32> to vector<8x128xf32>
    %cst_13 = arith.constant 1.000000e+00 : f32
    %30 = vector.broadcast %cst_13 : f32 to vector<8x128xf32>
    %31 = arith.subf %30, %21 : vector<8x128xf32>
    %32 = arith.mulf %24, %29 : vector<8x128xf32>
    %33 = arith.mulf %31, %31 : vector<8x128xf32>
    %34 = arith.mulf %32, %33 : vector<8x128xf32>
    %35 = math.log %21 : vector<8x128xf32>
    %cst_14 = arith.constant 0.000000e+00 : f32
    %36 = vector.broadcast %cst_14 : f32 to vector<8x128xf32>
    %37 = arith.subf %36, %35 : vector<8x128xf32>
    %38 = arith.mulf %34, %37 : vector<8x128xf32>
    %c0_15 = arith.constant 0 : index
    %c0_16 = arith.constant 0 : index
    %39 = vector.load %arg7[%c0_15, %c0_16] : memref<8x128xf32, #tpu.memory_space<vmem>>, vector<8x128xf32>
    %40 = vector.shape_cast %38 : vector<8x128xf32> to vector<1x8x128xf32>
    %cst_17 = arith.constant dense<0.000000e+00> : vector<8x128xf32>
    %41 = vector.multi_reduction <add>, %40, %cst_17 [0] : vector<1x8x128xf32> to vector<8x128xf32>
    %42 = arith.addf %39, %41 : vector<8x128xf32>
    %c0_18 = arith.constant 0 : index
    %c0_19 = arith.constant 0 : index
    %43 = vector.load %arg7[%c0_18, %c0_19] : memref<8x128xf32, #tpu.memory_space<vmem>>, vector<8x128xf32>
    tpu.vector_store %arg7[%c0_18, %c0_19], %42 {strides = array<i32>} : memref<8x128xf32, #tpu.memory_space<vmem>>, vector<8x128xf32>,
    %c0_20 = arith.constant 0 : index
    %c0_21 = arith.constant 0 : index
    %44 = vector.load %arg4[%c0_20, %c0_21] : memref<8x128xf32, #tpu.memory_space<vmem>>, vector<8x128xf32>
    %c0_22 = arith.constant 0 : index
    %c0_23 = arith.constant 0 : index
    %45 = vector.load %arg5[%c0_22, %c0_23] : memref<8x128xf32, #tpu.memory_space<vmem>>, vector<8x128xf32>
    %46 = arith.subf %44, %45 : vector<8x128xf32>
    %47 = math.absf %46 : vector<8x128xf32>
    %cst_24 = arith.constant 1.000000e+00 : f32
    %48 = vector.broadcast %cst_24 : f32 to vector<8x128xf32>
    %49 = arith.cmpf olt, %47, %48 : vector<8x128xf32>
    %cst_25 = arith.constant 5.000000e-01 : f32
    %50 = vector.broadcast %cst_25 : f32 to vector<8x128xf32>
    %51 = arith.mulf %50, %46 : vector<8x128xf32>
    %52 = arith.mulf %51, %46 : vector<8x128xf32>
    %cst_26 = arith.constant 5.000000e-01 : f32
    %53 = vector.broadcast %cst_26 : f32 to vector<8x128xf32>
    %54 = arith.subf %47, %53 : vector<8x128xf32>
    %55 = arith.select %49, %52, %54 : vector<8x128xi1>, vector<8x128xf32>
    %c0_27 = arith.constant 0 : index
    %c0_28 = arith.constant 0 : index
    %56 = vector.load %arg8[%c0_27, %c0_28] : memref<8x128xf32, #tpu.memory_space<vmem>>, vector<8x128xf32>
    %57 = vector.shape_cast %55 : vector<8x128xf32> to vector<1x8x128xf32>
    %cst_29 = arith.constant dense<0.000000e+00> : vector<8x128xf32>
    %58 = vector.multi_reduction <add>, %57, %cst_29 [0] : vector<1x8x128xf32> to vector<8x128xf32>
    %59 = arith.addf %56, %58 : vector<8x128xf32>
    %c0_30 = arith.constant 0 : index
    %c0_31 = arith.constant 0 : index
    %60 = vector.load %arg8[%c0_30, %c0_31] : memref<8x128xf32, #tpu.memory_space<vmem>>, vector<8x128xf32>
    tpu.vector_store %arg8[%c0_30, %c0_31], %59 {strides = array<i32>} : memref<8x128xf32, #tpu.memory_space<vmem>>, vector<8x128xf32>,
    %c0_i32_32 = arith.constant 0 : i32
    %61 = arith.cmpi eq, %arg0, %c0_i32_32 : i32
    %62 = arith.extui %61 : i1 to i32
    %c0_i32_33 = arith.constant 0 : i32
    %63 = arith.cmpi ne, %62, %c0_i32_33 : i32
    scf.if %63 {
      %c0_34 = arith.constant 0 : index
      %c0_35 = arith.constant 0 : index
      %64 = vector.load %arg7[%c0_34, %c0_35] : memref<8x128xf32, #tpu.memory_space<vmem>>, vector<8x128xf32>
      %65 = vector.shape_cast %64 : vector<8x128xf32> to vector<1x8x128xf32>
      %cst_36 = arith.constant dense<0.000000e+00> : vector<1xf32>
      %66 = vector.multi_reduction <add>, %65, %cst_36 [1, 2] : vector<1x8x128xf32> to vector<1xf32>
      %67 = vector.shape_cast %66 : vector<1xf32> to vector<1x1x1xf32>
      %68 = vector.extract %67[0, 0, 0] : f32 from vector<1x1x1xf32>
      %cst_37 = arith.constant 5.120000e+02 : f32
      %69 = arith.divf %68, %cst_37 : f32
      %c0_38 = arith.constant 0 : index
      %c0_39 = arith.constant 0 : index
      %70 = vector.load %arg8[%c0_38, %c0_39] : memref<8x128xf32, #tpu.memory_space<vmem>>, vector<8x128xf32>
      %71 = vector.shape_cast %70 : vector<8x128xf32> to vector<1x8x128xf32>
      %cst_40 = arith.constant dense<0.000000e+00> : vector<1xf32>
      %72 = vector.multi_reduction <add>, %71, %cst_40 [1, 2] : vector<1x8x128xf32> to vector<1xf32>
      %73 = vector.shape_cast %72 : vector<1xf32> to vector<1x1x1xf32>
      %74 = vector.extract %73[0, 0, 0] : f32 from vector<1x1x1xf32>
      %cst_41 = arith.constant 5.120000e+02 : f32
      %75 = arith.divf %74, %cst_41 : f32
      %cst_42 = arith.constant 1.000000e+00 : f32
      %76 = arith.mulf %cst_42, %69 : f32
      %cst_43 = arith.constant 1.000000e+00 : f32
      %77 = arith.mulf %cst_43, %75 : f32
      %78 = arith.addf %76, %77 : f32
      %c0_44 = arith.constant 0 : index
      %79 = memref.load %arg6[%c0_44] : memref<3xf32, #tpu.memory_space<smem>>
      memref.store %78, %arg6[%c0_44] : memref<3xf32, #tpu.memory_space<smem>>
      %c1 = arith.constant 1 : index
      %80 = memref.load %arg6[%c1] : memref<3xf32, #tpu.memory_space<smem>>
      memref.store %69, %arg6[%c1] : memref<3xf32, #tpu.memory_space<smem>>
      %c2 = arith.constant 2 : index
      %81 = memref.load %arg6[%c2] : memref<3xf32, #tpu.memory_space<smem>>
      memref.store %75, %arg6[%c2] : memref<3xf32, #tpu.memory_space<smem>>
    } else {
    }
    return
  }
  func.func @transform_0(%arg0: i32) -> (i32, i32) {
    %c0_i32 = arith.constant 0 : i32
    %c0_i32_0 = arith.constant 0 : i32
    return %arg0, %c0_i32 : i32, i32
  }
  func.func @transform_1(%arg0: i32) -> (i32, i32) {
    %c0_i32 = arith.constant 0 : i32
    %c0_i32_0 = arith.constant 0 : i32
    return %arg0, %c0_i32 : i32, i32
  }
  func.func @transform_2(%arg0: i32) -> (i32, i32) {
    %c0_i32 = arith.constant 0 : i32
    %c0_i32_0 = arith.constant 0 : i32
    return %arg0, %c0_i32 : i32, i32
  }
  func.func @transform_3(%arg0: i32) -> (i32, i32) {
    %c0_i32 = arith.constant 0 : i32
    %c0_i32_0 = arith.constant 0 : i32
    return %arg0, %c0_i32 : i32, i32
  }
  func.func @transform_4(%arg0: i32) -> (i32, i32) {
    %c0_i32 = arith.constant 0 : i32
    %c0_i32_0 = arith.constant 0 : i32
    return %arg0, %c0_i32 : i32, i32
  }
  func.func @transform_5(%arg0: i32) -> i32 {
    %c0_i32 = arith.constant 0 : i32
    %c0_i32_0 = arith.constant 0 : i32
    return %c0_i32 : i32
  }
}

</mosaic_0001>

<llo_original>
// kernel: tpu_custom_call.1
$region0: #{tpu_custom_call.1}
  #allocation0 [shape = 'u32[]', space=smem, size = 0x4, offset = 0x4, fixed_abs, tag = 'smem constant byte address 0x4 - core index']
  #allocation1 [shape = 'u32[144,128]{1,0:T(1,128)}', space=vmem, size = 0x12000, scoped, tag = 'internal scratch']
  #allocation2 [shape = 'f32[8,128]{1,0:T(8,128)}', space=vmem, size = 0x1000, scoped, tag = 'scratch operand']
  #allocation3 [shape = 'f32[8,128]{1,0:T(8,128)}', space=vmem, size = 0x1000, scoped, tag = 'scratch operand']
  %s0 = inlined_call_operand.hbm [shape: f32[8,128], index: 0, kind: input, shape index: {}]
  %s1 = inlined_call_operand.hbm [shape: f32[8,128], index: 1, kind: input, shape index: {}]
  %s2 = inlined_call_operand.hbm [shape: s32[8,128], index: 2, kind: input, shape index: {}]
  %s3 = inlined_call_operand.hbm [shape: f32[8,128], index: 3, kind: input, shape index: {}]
  %s4 = inlined_call_operand.hbm [shape: f32[8,128], index: 4, kind: input, shape index: {}]
  %s5 = inlined_call_operand.hbm [shape: f32[3], index: 5, kind: output, shape index: {}]
  %s6 = sld [smem:[#allocation0]]
  $region58: #{tpu_custom_call.1} parent=0
    _
  %s8 = ssub.s32 1, %s6
  %s9 = scalar_select 0, %s8, %s6
  $region1: #{tpu_custom_call.1} parent=0
    #allocation4 [shape = 'u8[4096]{0}', space=vmem, size = 0x1000, scoped, tag = 'input window, operand 0, single buffered']
    #allocation5 [shape = 's32[1]{0}', space=sflag, size = 0x4, scoped, tag = 'scoped memory for tpu_custom_call.1']
    #allocation6 [shape = 's32[1]{0}', space=sflag, size = 0x4, scoped, tag = 'scoped memory for tpu_custom_call.1']
    #allocation7 [shape = 'u8[4096]{0}', space=vmem, size = 0x1000, scoped, tag = 'input window, operand 1, single buffered']
    #allocation8 [shape = 's32[1]{0}', space=sflag, size = 0x4, scoped, tag = 'scoped memory for tpu_custom_call.1']
    #allocation9 [shape = 'u8[4096]{0}', space=vmem, size = 0x1000, scoped, tag = 'input window, operand 2, single buffered']
    #allocation10 [shape = 'u8[4096]{0}', space=vmem, size = 0x1000, scoped, tag = 'input window, operand 3, single buffered']
    #allocation11 [shape = 's32[1]{0}', space=sflag, size = 0x4, scoped, tag = 'scoped memory for tpu_custom_call.1']
    #allocation12 [shape = 'u8[4096]{0}', space=vmem, size = 0x1000, scoped, tag = 'input window, operand 4, single buffered']
    #allocation13 [shape = 'u8[512]{0}', space=smem, size = 0x200, scoped, tag = 'output window, operand 0, single buffered']
    %10 = vsyncpa [#allocation5], 0
    %11 = vsyncpa [#allocation8], 0
    %12 = vsyncpa [#allocation11], 0
    %13 = vsyncpa [#allocation6], 0
    // Predicated region
    $region2: #{tpu_custom_call.1} parent=1 // pred_check
      _
    $region3: #{tpu_custom_call.1} parent=1 // pred_check_branch
      %15 = sbr.rel (0) target = $region5
    $region4: #{tpu_custom_call.1} parent=1 // pred_region
      %s17 = ssub.s32 128, 128
      %18 = vsyncadd [#allocation5], %s17
      %s20 = sshll.u32 [#allocation4], 4
      %s21 = int_to_ptr.vmem [resolvable:$true] %s20
      %23 = dma.hbm_to_vmem [thread:$0]  %s0, 128, %s21, [#allocation5]
    $region5: #{tpu_custom_call.1} parent=1 // pred_fallthru
      _
    // Predicated region
    $region6: #{tpu_custom_call.1} parent=1 // pred_check
      _
    $region7: #{tpu_custom_call.1} parent=1 // pred_check_branch
      %25 = sbr.rel (0) target = $region9
    $region8: #{tpu_custom_call.1} parent=1 // pred_region
      %s27 = ssub.s32 128, 128
      %28 = vsyncadd [#allocation8], %s27
      %s30 = sshll.u32 [#allocation7], 4
      %s31 = int_to_ptr.vmem [resolvable:$true] %s30
      %33 = dma.hbm_to_vmem [thread:$0]  %s1, 128, %s31, [#allocation8]
    $region9: #{tpu_custom_call.1} parent=1 // pred_fallthru
      _
    // Predicated region
    $region10: #{tpu_custom_call.1} parent=1 // pred_check
      _
    $region11: #{tpu_custom_call.1} parent=1 // pred_check_branch
      %35 = sbr.rel (0) target = $region13
    $region12: #{tpu_custom_call.1} parent=1 // pred_region
      %s37 = ssub.s32 128, 128
      %38 = vsyncadd [#allocation8], %s37
      %s40 = sshll.u32 [#allocation9], 4
      %s41 = int_to_ptr.vmem [resolvable:$true] %s40
      %43 = dma.hbm_to_vmem [thread:$0]  %s2, 128, %s41, [#allocation8]
    $region13: #{tpu_custom_call.1} parent=1 // pred_fallthru
      _
    // Predicated region
    $region14: #{tpu_custom_call.1} parent=1 // pred_check
      _
    $region15: #{tpu_custom_call.1} parent=1 // pred_check_branch
      %45 = sbr.rel (0) target = $region17
    $region16: #{tpu_custom_call.1} parent=1 // pred_region
      %s47 = ssub.s32 128, 128
      %48 = vsyncadd [#allocation11], %s47
      %s50 = sshll.u32 [#allocation10], 4
      %s51 = int_to_ptr.vmem [resolvable:$true] %s50
      %53 = dma.hbm_to_vmem [thread:$0]  %s3, 128, %s51, [#allocation11]
    $region17: #{tpu_custom_call.1} parent=1 // pred_fallthru
      _
    // Predicated region
    $region18: #{tpu_custom_call.1} parent=1 // pred_check
      _
    $region19: #{tpu_custom_call.1} parent=1 // pred_check_branch
      %55 = sbr.rel (0) target = $region21
    $region20: #{tpu_custom_call.1} parent=1 // pred_region
      %s57 = ssub.s32 128, 128
      %58 = vsyncadd [#allocation11], %s57
      %s60 = sshll.u32 [#allocation12], 4
      %s61 = int_to_ptr.vmem [resolvable:$true] %s60
      %63 = dma.hbm_to_vmem [thread:$0]  %s4, 128, %s61, [#allocation11]
    $region21: #{tpu_custom_call.1} parent=1 // pred_fallthru
      _
    // Predicated region
    $region22: #{tpu_custom_call.1} parent=1 // pred_check
      _
    $region23: #{tpu_custom_call.1} parent=1 // pred_check_branch
      %65 = sbr.rel (0) target = $region25
    $region24: #{tpu_custom_call.1} parent=1 // pred_region
      %66 = dma.done [#allocation5], 128
    $region25: #{tpu_custom_call.1} parent=1 // pred_fallthru
      _
    // Predicated region
    $region26: #{tpu_custom_call.1} parent=1 // pred_check
      _
    $region27: #{tpu_custom_call.1} parent=1 // pred_check_branch
      %68 = sbr.rel (0) target = $region29
    $region28: #{tpu_custom_call.1} parent=1 // pred_region
      %69 = dma.done [#allocation8], 128
    $region29: #{tpu_custom_call.1} parent=1 // pred_fallthru
      _
    // Predicated region
    $region30: #{tpu_custom_call.1} parent=1 // pred_check
      _
    $region31: #{tpu_custom_call.1} parent=1 // pred_check_branch
      %71 = sbr.rel (0) target = $region33
    $region32: #{tpu_custom_call.1} parent=1 // pred_region
      %72 = dma.done [#allocation8], 128
    $region33: #{tpu_custom_call.1} parent=1 // pred_fallthru
      _
    // Predicated region
    $region34: #{tpu_custom_call.1} parent=1 // pred_check
      _
    $region35: #{tpu_custom_call.1} parent=1 // pred_check_branch
      %74 = sbr.rel (0) target = $region37
    $region36: #{tpu_custom_call.1} parent=1 // pred_region
      %75 = dma.done [#allocation11], 128
    $region37: #{tpu_custom_call.1} parent=1 // pred_fallthru
      _
    // Predicated region
    $region38: #{tpu_custom_call.1} parent=1 // pred_check
      _
    $region39: #{tpu_custom_call.1} parent=1 // pred_check_branch
      %77 = sbr.rel (0) target = $region41
    $region40: #{tpu_custom_call.1} parent=1 // pred_region
      %78 = dma.done [#allocation11], 128
    $region41: #{tpu_custom_call.1} parent=1 // pred_fallthru
      _
    %p79 = scmp.eq.s32.totalorder 0, 0
    // Predicated region
    $region42: #{tpu_custom_call.1} parent=1 // pred_check
      %p80 = pneg %p79
    $region43: #{tpu_custom_call.1} parent=1 // pred_check_branch
      %82 = sbr.rel (%p80) target = $region45
    $region44: #{tpu_custom_call.1} parent=1 // pred_region
      %83 = vst [vmem:[#allocation2] sm:$0xff] 0.0
      %84 = vst [vmem:[#allocation3] sm:$0xff] 0.0
    $region45: #{tpu_custom_call.1} parent=1 // pred_fallthru
      _
    %v85 = vld [vmem:[#allocation4] sm:$0xff]
    %v86 = vld [vmem:[#allocation7] sm:$0xff]
    %v87 = vld [vmem:[#allocation9] sm:$0xff]
    %vm88 = vcmp.eq.s32.totalorder %v87, 1
    %v89 = vsub.f32 %v86, %v85
    %v90 = vsub.f32 %v85, %v86
    %v91 = vsel %vm88, %v89, %v90
    %v92 = vsub.f32 0.0, %v91
    %v93 = vmul.f32 %v92, 1.442695
    %v94 = vpow.pop %v93
    %v95 = vadd.f32 %v94, 1.0
    %v96 = vrcp.pop %v95
    %v97 = vmul.f32 1.0, %v96
    %v98 = vmax.f32 %v97, 1e-06
    %v99 = vmin.f32 %v98, 0.999999
    %v100 = vsel %vm88, 0.75, 0.25
    %vm101 = vcmp.eq.s32.totalorder %v87, 0
    %vm102 = vmor %vm101, %vm88
    %v103 = vsel %vm102, 1, 0
    %v104 = vcvt.s32.f32 %v103
    %v105 = vsub.f32 1.0, %v99
    %v106 = vmul.f32 %v100, %v104
    %v107 = vmul.f32 %v105, %v105
    %v108 = vmul.f32 %v106, %v107
    %v109 = vlog2.pop %v99
    %v110 = vmul.f32 %v109, 0.6931472
    %v111 = vsub.f32 0.0, %v110
    %v112 = vmul.f32 %v108, %v111
    %v113 = vld [vmem:[#allocation2] sm:$0xff]
    %v114 = vadd.f32 %v112, 0.0
    %v115 = vadd.f32 %v113, %v114
    %116 = vst [vmem:[#allocation2] sm:$0xff] %v115
    %v117 = vld [vmem:[#allocation10] sm:$0xff]
    %v118 = vld [vmem:[#allocation12] sm:$0xff]
    %v119 = vsub.f32 %v117, %v118
    %v120 = vand.u32 2147483647, %v119
    %vm121 = vcmp.lt.f32.partialorder %v120, 1.0
    %v122 = vmul.f32 %v119, 0.5
    %v123 = vmul.f32 %v122, %v119
    %v124 = vsub.f32 %v120, 0.5
    %v125 = vsel %vm121, %v123, %v124
    %v126 = vld [vmem:[#allocation3] sm:$0xff]
    %v127 = vadd.f32 %v125, 0.0
    %v128 = vadd.f32 %v126, %v127
    %129 = vst [vmem:[#allocation3] sm:$0xff] %v128
    // Predicated region
    $region46: #{tpu_custom_call.1} parent=1 // pred_check
      %p130 = pneg %p79
    $region47: #{tpu_custom_call.1} parent=1 // pred_check_branch
      %132 = sbr.rel (%p130) target = $region49
    $region48: #{tpu_custom_call.1} parent=1 // pred_region
      %v133 = vld [vmem:[#allocation2] sm:$0xff]
      %134 = vadd.xlane.f32.xlu0 %v133
      %v135 = vpop.xlane.xlu0 %134
      %v136 = vrot.slane %v135, 4
      %v137 = vadd.f32 %v135, %v136
      %v138 = vrot.slane %v137, 2
      %v139 = vadd.f32 %v137, %v138
      %v140 = vrot.slane %v139, 1
      %v141 = vadd.f32 %v139, %v140
      %s142 = vtos %v141
      %v143 = vrcp.pop 512.0
      %s144 = vtos %v143
      %s145 = smul.f32 %s142, %s144
      %v146 = vld [vmem:[#allocation3] sm:$0xff]
      %147 = vadd.xlane.f32.xlu0 %v146
      %v148 = vpop.xlane.xlu0 %147
      %v149 = vrot.slane %v148, 4
      %v150 = vadd.f32 %v148, %v149
      %v151 = vrot.slane %v150, 2
      %v152 = vadd.f32 %v150, %v151
      %v153 = vrot.slane %v152, 1
      %v154 = vadd.f32 %v152, %v153
      %s155 = vtos %v154
      %v156 = vrcp.pop 512.0
      %s157 = vtos %v156
      %s158 = smul.f32 %s155, %s157
      %s159 = sadd.f32 %s145, %s158
      %s160 = scalar_lea.smem [#allocation13], 0
      %161 = sst [smem:[%s160]] %s159
      %s162 = scalar_lea.smem [#allocation13], 1
      %163 = sst [smem:[%s162]] %s145
      %s164 = scalar_lea.smem [#allocation13], 2
      %165 = sst [smem:[%s164]] %s158
    $region49: #{tpu_custom_call.1} parent=1 // pred_fallthru
      _
    // Predicated region
    $region50: #{tpu_custom_call.1} parent=1 // pred_check
      _
    $region51: #{tpu_custom_call.1} parent=1 // pred_check_branch
      %167 = sbr.rel (0) target = $region53
    $region52: #{tpu_custom_call.1} parent=1 // pred_region
      %s169 = ssub.s32 16, 16
      %170 = vsyncadd [#allocation6], %s169
      %173 = dma.smem_to_hbm [#allocation13], 16, %s5, [#allocation6]
    $region53: #{tpu_custom_call.1} parent=1 // pred_fallthru
      _
    // Predicated region
    $region54: #{tpu_custom_call.1} parent=1 // pred_check
      _
    $region55: #{tpu_custom_call.1} parent=1 // pred_check_branch
      %175 = sbr.rel (0) target = $region57
    $region56: #{tpu_custom_call.1} parent=1 // pred_region
      %176 = dma.done [#allocation6], 16
    $region57: #{tpu_custom_call.1} parent=1 // pred_fallthru
      _
    %177 = sfence
    %178 = vsyncpa [#allocation5], 1
    %179 = vsyncpa [#allocation8], 1
    %180 = vsyncpa [#allocation11], 1
    %181 = vsyncpa [#allocation6], 1

</llo_original>
